<compile_context>
chip_gen: v6e
topology: v6e:2x2x1
jax: 0.10.0
libtpu: 0.0.40
codegen_flags: <defaults>
</compile_context>

<pallas_src>
import functools

import jax
import jax.numpy as jnp
from jax.experimental import pallas as pl
from jax.experimental.pallas import tpu as pltpu


def _ffn_gated_kernel(x_ref, w01_ref, wo_ref, o_ref, acc_ref):
    # x_ref:   (tm, E)      token tile
    # w01_ref: (E, 2*tf)    [gate | up] columns for this F tile
    # wo_ref:  (tf, E)      down-projection rows for this F tile
    # o_ref:   (tm, E)
    # acc_ref: (tm, E) f32  accumulator across the F (reduction) axis
    k = pl.program_id(1)

    @pl.when(k == 0)
    def _():
        acc_ref[...] = jnp.zeros_like(acc_ref)

    x = x_ref[...]

    # Fused gate+up projection: one MXU matmul, f32 accumulation.
    h = jnp.dot(x, w01_ref[...], preferred_element_type=jnp.float32)
    tf = h.shape[1] // 2
    gate = jax.nn.gelu(h[:, :tf], approximate=True)   # tanh GELU (EUP), f32
    up = h[:, tf:]
    hidden = (gate * up).astype(wo_ref.dtype)

    # Partial down-projection for this F tile, accumulated in f32.
    acc_ref[...] += jnp.dot(hidden, wo_ref[...], preferred_element_type=jnp.float32)

    @pl.when(k == pl.num_programs(1) - 1)
    def _():
        o_ref[...] = acc_ref[...].astype(o_ref.dtype)


def _pick_tile(total, target, multiple, min_steps=1):
    """Largest divisor of `total` that is a multiple of `multiple`, <= target
    (and giving >= min_steps grid steps when possible); else the full extent."""
    cap = min(total, target)
    if min_steps > 1:
        cap = min(cap, max(multiple, total // min_steps))
    best = None
    t = multiple
    while t <= cap:
        if total % t == 0:
            best = t
        t += multiple
    return best if best is not None else total


@functools.partial(jax.jit, static_argnames=("tm", "tf"))
def ffn_gated(x, w0_t, w1_t, wo_t, *, tm=None, tf=None):
    """x: [B, T, E]; w0_t/w1_t: [E, F]; wo_t: [F, E] (all pre-transposed)."""
    B, T, E = x.shape
    F_dim = w0_t.shape[1]
    assert w1_t.shape == (E, F_dim) and wo_t.shape == (F_dim, E)
    M = B * T

    # Tile selection: tm parallel axis (>=2 steps when possible, feeds both
    # v7x TensorCores); tf bounds weight/intermediate VMEM footprint.
    if tm is None:
        tm = _pick_tile(M, 256, 8, min_steps=2)
    if tf is None:
        tf = _pick_tile(F_dim, 512, 128)
    assert M % tm == 0 and F_dim % tf == 0
    n_k = F_dim // tf

    x2d = x.reshape(M, E)

    # Block-interleave W0/W1 so block k of W01 = [W0[:, k*tf:(k+1)*tf] | W1[:, ...]].
    w01 = jnp.concatenate(
        [w0_t.reshape(E, n_k, tf), w1_t.reshape(E, n_k, tf)], axis=2
    ).reshape(E, 2 * F_dim)

    # VMEM footprint estimate (double-buffered in/out blocks + f32 acc).
    itemsize = jnp.dtype(x.dtype).itemsize
    vmem_est = (
        2 * tm * E            # x tile
        + 2 * E * 2 * tf      # W01 tile
        + 2 * tf * E          # Wo tile
        + 2 * tm * E          # out tile
    ) * itemsize + tm * E * 4  # acc scratch
    compiler_kwargs = dict(dimension_semantics=("parallel", "arbitrary"))
    if vmem_est > (32 << 20):
        # Raise the scoped VMEM limit, capped for v7x's 64 MiB physical VMEM.
        compiler_kwargs["vmem_limit_bytes"] = min(int(vmem_est * 1.25), 64 << 20)

    cost = pl.CostEstimate(
        flops=2 * M * E * 2 * F_dim + 2 * M * F_dim * E,
        transcendentals=M * F_dim,
        bytes_accessed=(x2d.size + w01.size + wo_t.size) * itemsize
        + M * E * itemsize,
    )

    out2d = pl.pallas_call(
        _ffn_gated_kernel,
        out_shape=jax.ShapeDtypeStruct((M, E), x.dtype),
        grid_spec=pltpu.PrefetchScalarGridSpec(
            num_scalar_prefetch=0,
            grid=(M // tm, n_k),
            in_specs=[
                pl.BlockSpec((tm, E), lambda i, k: (i, 0)),        # x tile
                pl.BlockSpec((E, 2 * tf), lambda i, k: (0, k)),    # W01 tile
                pl.BlockSpec((tf, E), lambda i, k: (k, 0)),        # Wo tile
            ],
            out_specs=pl.BlockSpec((tm, E), lambda i, k: (i, 0)),
            scratch_shapes=[pltpu.VMEM((tm, E), jnp.float32)],
        ),
        compiler_params=pltpu.CompilerParams(**compiler_kwargs),
        cost_estimate=cost,
    )(x2d, w01, wo_t)

    return out2d.reshape(B, T, E)


def _reference(x, w0_t, w1_t, wo_t):
    h = jnp.asarray(x, jnp.float32)
    w0 = jnp.asarray(w0_t, jnp.float32)
    w1 = jnp.asarray(w1_t, jnp.float32)
    wo = jnp.asarray(wo_t, jnp.float32)
    gate = jax.nn.gelu(h @ w0, approximate=True)
    up = h @ w1
    return (gate * up) @ wo


if __name__ == "__main__":
    # Small shapes consistent with the module: batch=2, seq=8, n_embed=32, n_ffn=64.
    B, T, E, F_dim = 2, 8, 32, 64

    key = jax.random.PRNGKey(0)
    kx, k0, k1, ko = jax.random.split(key, 4)

    x = jax.random.normal(kx, (B, T, E), dtype=jnp.float32)
    # Deterministic "Linear"-style init (scaled uniform), stored pre-transposed
    # as [in, out] so the kernel computes x @ W == PyTorch's x @ weight.T.
    w0_t = jax.random.uniform(k0, (E, F_dim), jnp.float32, -1.0, 1.0) / jnp.sqrt(E)
    w1_t = jax.random.uniform(k1, (E, F_dim), jnp.float32, -1.0, 1.0) / jnp.sqrt(E)
    wo_t = jax.random.uniform(ko, (F_dim, E), jnp.float32, -1.0, 1.0) / jnp.sqrt(F_dim)

    # f32 run — strict check against the reference.
    out = ffn_gated(x, w0_t, w1_t, wo_t)
    out = jax.block_until_ready(out)
    ref = _reference(x, w0_t, w1_t, wo_t).reshape(B, T, E)
    assert out.shape == (B, T, E)
    assert jnp.allclose(out, ref, atol=1e-4, rtol=1e-4), "f32 mismatch vs reference"

    # bf16 run — production dtype for the MXU; loose check.
    out_bf16 = ffn_gated(
        x.astype(jnp.bfloat16),
        w0_t.astype(jnp.bfloat16),
        w1_t.astype(jnp.bfloat16),
        wo_t.astype(jnp.bfloat16),
    )
    out_bf16 = jax.block_until_ready(out_bf16)
    ref_bf16 = _reference(
        x.astype(jnp.bfloat16),
        w0_t.astype(jnp.bfloat16),
        w1_t.astype(jnp.bfloat16),
        wo_t.astype(jnp.bfloat16),
    ).reshape(B, T, E)
    assert jnp.allclose(
        out_bf16.astype(jnp.float32), ref_bf16, atol=1e-1, rtol=1e-1
    ), "bf16 mismatch vs reference"

    print("KERNEL_OK")
</pallas_src>

<mosaic_0001>
module attributes {stable_mosaic.version = 11 : i64} {
  func.func @_ffn_gated_kernel(%arg0: i32, %arg1: i32, %arg2: memref<8x32xf32, #tpu.memory_space<vmem>>, %arg3: memref<32x128xf32, #tpu.memory_space<vmem>>, %arg4: memref<64x32xf32, #tpu.memory_space<vmem>>, %arg5: memref<8x32xf32, #tpu.memory_space<vmem>>, %arg6: memref<8x32xf32, #tpu.memory_space<vmem>>) attributes {dimension_semantics = [#tpu.dimension_semantics<parallel>, #tpu.dimension_semantics<arbitrary>], iteration_bounds = array<i64: 2, 1>, scalar_prefetch = 0 : i64, scratch_operands = 1 : i64, tpu.core_type = #tpu.core_type<tc>, window_params = [{transform_indices = @transform_0, window_bounds = array<i64: 8, 32>}, {transform_indices = @transform_1, window_bounds = array<i64: 32, 128>}, {transform_indices = @transform_2, window_bounds = array<i64: 64, 32>}, {transform_indices = @transform_3, window_bounds = array<i64: 8, 32>}]} {
    %c0_i32 = arith.constant 0 : i32
    %0 = arith.cmpi eq, %arg1, %c0_i32 : i32
    %1 = arith.extui %0 : i1 to i32
    %c0_i32_0 = arith.constant 0 : i32
    %2 = arith.cmpi ne, %1, %c0_i32_0 : i32
    scf.if %2 {
      %cst_17 = arith.constant 0.000000e+00 : f32
      %30 = vector.broadcast %cst_17 : f32 to vector<8x32xf32>
      %c0_18 = arith.constant 0 : index
      %c0_19 = arith.constant 0 : index
      %31 = vector.load %arg6[%c0_18, %c0_19] : memref<8x32xf32, #tpu.memory_space<vmem>>, vector<8x32xf32>
      tpu.vector_store %arg6[%c0_18, %c0_19], %30 {strides = array<i32>} : memref<8x32xf32, #tpu.memory_space<vmem>>, vector<8x32xf32>,
    } else {
    }
    %c0 = arith.constant 0 : index
    %c0_1 = arith.constant 0 : index
    %3 = vector.load %arg2[%c0, %c0_1] : memref<8x32xf32, #tpu.memory_space<vmem>>, vector<8x32xf32>
    %c0_2 = arith.constant 0 : index
    %c0_3 = arith.constant 0 : index
    %4 = vector.load %arg3[%c0_2, %c0_3] : memref<32x128xf32, #tpu.memory_space<vmem>>, vector<32x128xf32>
    %cst = arith.constant dense<0.000000e+00> : vector<8x128xf32>
    %5 = tpu.matmul %3, %4, %cst {dimension_numbers = #tpu.dot_dimension_numbers<[1], [0], [0], [1], [0, 0, 1, 1], [], []>} : vector<8x32xf32>, vector<32x128xf32>, vector<8x128xf32> -> vector<8x128xf32>
    %6 = vector.extract_strided_slice %5 {offsets = [0, 0], sizes = [8, 64], strides = [1, 1]} : vector<8x128xf32> to vector<8x64xf32>
    %7 = arith.mulf %6, %6 : vector<8x64xf32>
    %8 = arith.mulf %6, %7 : vector<8x64xf32>
    %cst_4 = arith.constant 4.471500e-02 : f32
    %9 = vector.broadcast %cst_4 : f32 to vector<8x64xf32>
    %10 = arith.mulf %9, %8 : vector<8x64xf32>
    %11 = arith.addf %6, %10 : vector<8x64xf32>
    %cst_5 = arith.constant 0.797884583 : f32
    %12 = vector.broadcast %cst_5 : f32 to vector<8x64xf32>
    %13 = arith.mulf %12, %11 : vector<8x64xf32>
    %14 = math.tanh %13 : vector<8x64xf32>
    %cst_6 = arith.constant 1.000000e+00 : f32
    %15 = vector.broadcast %cst_6 : f32 to vector<8x64xf32>
    %16 = arith.addf %15, %14 : vector<8x64xf32>
    %cst_7 = arith.constant 5.000000e-01 : f32
    %17 = vector.broadcast %cst_7 : f32 to vector<8x64xf32>
    %18 = arith.mulf %17, %16 : vector<8x64xf32>
    %19 = arith.mulf %6, %18 : vector<8x64xf32>
    %20 = vector.extract_strided_slice %5 {offsets = [0, 64], sizes = [8, 64], strides = [1, 1]} : vector<8x128xf32> to vector<8x64xf32>
    %21 = arith.mulf %19, %20 : vector<8x64xf32>
    %c0_8 = arith.constant 0 : index
    %c0_9 = arith.constant 0 : index
    %22 = vector.load %arg6[%c0_8, %c0_9] : memref<8x32xf32, #tpu.memory_space<vmem>>, vector<8x32xf32>
    %c0_10 = arith.constant 0 : index
    %c0_11 = arith.constant 0 : index
    %23 = vector.load %arg4[%c0_10, %c0_11] : memref<64x32xf32, #tpu.memory_space<vmem>>, vector<64x32xf32>
    %cst_12 = arith.constant dense<0.000000e+00> : vector<8x32xf32>
    %24 = tpu.matmul %21, %23, %cst_12 {dimension_numbers = #tpu.dot_dimension_numbers<[1], [0], [0], [1], [0, 0, 1, 1], [], []>} : vector<8x64xf32>, vector<64x32xf32>, vector<8x32xf32> -> vector<8x32xf32>
    %25 = arith.addf %22, %24 : vector<8x32xf32>
    %c0_13 = arith.constant 0 : index
    %c0_14 = arith.constant 0 : index
    %26 = vector.load %arg6[%c0_13, %c0_14] : memref<8x32xf32, #tpu.memory_space<vmem>>, vector<8x32xf32>
    tpu.vector_store %arg6[%c0_13, %c0_14], %25 {strides = array<i32>} : memref<8x32xf32, #tpu.memory_space<vmem>>, vector<8x32xf32>,
    %c0_i32_15 = arith.constant 0 : i32
    %27 = arith.cmpi eq, %arg1, %c0_i32_15 : i32
    %28 = arith.extui %27 : i1 to i32
    %c0_i32_16 = arith.constant 0 : i32
    %29 = arith.cmpi ne, %28, %c0_i32_16 : i32
    scf.if %29 {
      %c0_17 = arith.constant 0 : index
      %c0_18 = arith.constant 0 : index
      %30 = vector.load %arg6[%c0_17, %c0_18] : memref<8x32xf32, #tpu.memory_space<vmem>>, vector<8x32xf32>
      %c0_19 = arith.constant 0 : index
      %c0_20 = arith.constant 0 : index
      %31 = vector.load %arg5[%c0_19, %c0_20] : memref<8x32xf32, #tpu.memory_space<vmem>>, vector<8x32xf32>
      tpu.vector_store %arg5[%c0_19, %c0_20], %30 {strides = array<i32>} : memref<8x32xf32, #tpu.memory_space<vmem>>, vector<8x32xf32>,
    } else {
    }
    return
  }
  func.func @transform_0(%arg0: i32, %arg1: i32) -> (i32, i32) {
    %c0_i32 = arith.constant 0 : i32
    %c0_i32_0 = arith.constant 0 : i32
    return %arg0, %c0_i32 : i32, i32
  }
  func.func @transform_1(%arg0: i32, %arg1: i32) -> (i32, i32) {
    %c0_i32 = arith.constant 0 : i32
    %c0_i32_0 = arith.constant 0 : i32
    return %c0_i32, %arg1 : i32, i32
  }
  func.func @transform_2(%arg0: i32, %arg1: i32) -> (i32, i32) {
    %c0_i32 = arith.constant 0 : i32
    %c0_i32_0 = arith.constant 0 : i32
    return %arg1, %c0_i32 : i32, i32
  }
  func.func @transform_3(%arg0: i32, %arg1: i32) -> (i32, i32) {
    %c0_i32 = arith.constant 0 : i32
    %c0_i32_0 = arith.constant 0 : i32
    return %arg0, %c0_i32 : i32, i32
  }
}

</mosaic_0001>

<llo_original>
// kernel: ffn_gated.1
$region0: #{ffn_gated.1}
  #allocation0 [shape = 'u32[]', space=smem, size = 0x4, offset = 0x4, fixed_abs, tag = 'smem constant byte address 0x4 - core index']
  #allocation1 [shape = 'u32[144,128]{1,0:T(1,128)}', space=vmem, size = 0x12000, scoped, tag = 'internal scratch']
  #allocation2 [shape = 'f32[8,32]{1,0:T(8,128)}', space=vmem, size = 0x1000, scoped, tag = 'scratch operand']
  %s0 = inlined_call_operand.vmem [shape: f32[16,32], index: 0, kind: input, shape index: {}]
  %s1 = inlined_call_operand.vmem [shape: f32[32,128], index: 1, kind: input, shape index: {}]
  %s2 = inlined_call_operand.vmem [shape: f32[64,32], index: 2, kind: input, shape index: {}]
  %s3 = inlined_call_operand.hbm [shape: f32[16,32], index: 3, kind: output, shape index: {}]
  %s4 = sld [smem:[#allocation0]]
  $region53: #{ffn_gated.1} parent=0
    _
  %s6 = ssub.s32 1, %s4
  %s7 = scalar_select 0, %s6, %s4
  $region1: #{ffn_gated.1} parent=0
    #allocation3 [shape = 'u8[8192]{0}', space=vmem, size = 0x2000, scoped, tag = 'output window, operand 0']
    #allocation4 [shape = 's32[2]{0}', space=sflag, size = 0x8, scoped, tag = 'scoped memory for ffn_gated.1']
    %8 = vsyncpa [#allocation4], 0
    %s9 = scalar_lea.sflag [#allocation4], 1
    %10 = vsyncpa %s9, 0
    loop: start=0, step=1, limit=4
    $region2: #{ffn_gated.1} parent=1 // loop_pre_header
      _
    $region3: #{ffn_gated.1} parent=1 // loop_header
      %s12 = sphi 0, %s16
      %p13 = scmp.ge.s32.totalorder %s12, 4
      %s19 = sphi 0, %s31
      %s20 = sphi 0, %s27
      %s21 = sphi 0, %s19
      %s22 = sphi 0, %s20
      %s23 = sphi 0, %s21
      %s24 = sphi 0, %s22
      %s34 = sphi 0, %s36
      %s37 = sphi 0, %s34
      %s38 = sphi 0, %s37
      %s54 = sphi 0, %s38
      %s60 = sphi 0, %s62
      %s63 = sphi 0, %s60
      %s64 = sphi 0, %s63
      %s80 = sphi 0, %s64
      %s86 = sphi 0, %s88
      %s89 = sphi 0, %s86
      %s90 = sphi 0, %s89
      %s106 = sphi 0, %s90
      %s112 = sphi 0, %s114
      %s115 = sphi 0, %s112
      %s116 = sphi 0, %s115
      %s132 = sphi 0, %s116
    $region4: #{ffn_gated.1} parent=1 // loop_header_branch
      %15 = sbr.rel (%p13) target = $region8
    $region5: #{ffn_gated.1} parent=1 // loop_body
      %s17 = ssub.s32 %s12, 1
      %s18 = ssub.s32 %s12, 2
      %s25 = sadd.s32 1, %s20
      %p26 = scmp.ge.s32.totalorder %s25, 1
      %s27 = scalar_select %p26, 0, %s25
      %s28 = sadd.s32 1, %s19
      %s29 = scalar_select %p26, %s28, %s19
      %p30 = scmp.ge.s32.totalorder %s29, 2
      %s31 = scalar_select %p30, 0, %s29
      %s32 = ssub.s32 %s19, %s31
      %p33 = scmp.eq.s32.totalorder %s32, 0
      %s35 = sadd.s32 %s34, 1
      %s36 = scalar_select %p33, %s34, %s35
      %p39 = pneg %p33
      %p40 = scmp.eq.s32.totalorder %s12, 1
      %p41 = por %p39, %p40
      %p42 = scmp.ne.s32.totalorder %s34, %s37
      %p43 = scmp.eq.s32.totalorder %s12, 0
      %p44 = por %p42, %p43
      %p45 = scmp.ne.s32.totalorder %s34, %s37
      %p46 = scmp.eq.s32.totalorder %s17, 1
      %p47 = por %p45, %p46
      %p48 = scmp.ne.s32.totalorder %s37, %s38
      %p49 = scmp.eq.s32.totalorder %s17, 0
      %p50 = por %p48, %p49
      %p51 = scmp.ne.s32.totalorder %s37, %s38
      %p52 = scmp.eq.s32.totalorder %s18, 1
      %p53 = por %p51, %p52
      %p55 = scmp.ne.s32.totalorder %s38, %s54
      %p56 = scmp.eq.s32.totalorder %s18, 0
      %p57 = por %p55, %p56
      %s58 = ssub.s32 %s20, %s27
      %p59 = scmp.eq.s32.totalorder %s58, 0
      %s61 = sadd.s32 %s60, 1
      %s62 = scalar_select %p59, %s60, %s61
      %p65 = pneg %p59
      %p66 = scmp.eq.s32.totalorder %s12, 1
      %p67 = por %p65, %p66
      %p68 = scmp.ne.s32.totalorder %s60, %s63
      %p69 = scmp.eq.s32.totalorder %s12, 0
      %p70 = por %p68, %p69
      %p71 = scmp.ne.s32.totalorder %s60, %s63
      %p72 = scmp.eq.s32.totalorder %s17, 1
      %p73 = por %p71, %p72
      %p74 = scmp.ne.s32.totalorder %s63, %s64
      %p75 = scmp.eq.s32.totalorder %s17, 0
      %p76 = por %p74, %p75
      %p77 = scmp.ne.s32.totalorder %s63, %s64
      %p78 = scmp.eq.s32.totalorder %s18, 1
      %p79 = por %p77, %p78
      %p81 = scmp.ne.s32.totalorder %s64, %s80
      %p82 = scmp.eq.s32.totalorder %s18, 0
      %p83 = por %p81, %p82
      %s84 = ssub.s32 %s20, %s27
      %p85 = scmp.eq.s32.totalorder %s84, 0
      %s87 = sadd.s32 %s86, 1
      %s88 = scalar_select %p85, %s86, %s87
      %p91 = pneg %p85
      %p92 = scmp.eq.s32.totalorder %s12, 1
      %p93 = por %p91, %p92
      %p94 = scmp.ne.s32.totalorder %s86, %s89
      %p95 = scmp.eq.s32.totalorder %s12, 0
      %p96 = por %p94, %p95
      %p97 = scmp.ne.s32.totalorder %s86, %s89
      %p98 = scmp.eq.s32.totalorder %s17, 1
      %p99 = por %p97, %p98
      %p100 = scmp.ne.s32.totalorder %s89, %s90
      %p101 = scmp.eq.s32.totalorder %s17, 0
      %p102 = por %p100, %p101
      %p103 = scmp.ne.s32.totalorder %s89, %s90
      %p104 = scmp.eq.s32.totalorder %s18, 1
      %p105 = por %p103, %p104
      %p107 = scmp.ne.s32.totalorder %s90, %s106
      %p108 = scmp.eq.s32.totalorder %s18, 0
      %p109 = por %p107, %p108
      %s110 = ssub.s32 %s19, %s31
      %p111 = scmp.eq.s32.totalorder %s110, 0
      %s113 = sadd.s32 %s112, 1
      %s114 = scalar_select %p111, %s112, %s113
      %p117 = pneg %p111
      %p118 = scmp.eq.s32.totalorder %s12, 1
      %p119 = por %p117, %p118
      %p120 = scmp.ne.s32.totalorder %s112, %s115
      %p121 = scmp.eq.s32.totalorder %s12, 0
      %p122 = por %p120, %p121
      %p123 = scmp.ne.s32.totalorder %s112, %s115
      %p124 = scmp.eq.s32.totalorder %s17, 1
      %p125 = por %p123, %p124
      %p126 = scmp.ne.s32.totalorder %s115, %s116
      %p127 = scmp.eq.s32.totalorder %s17, 0
      %p128 = por %p126, %p127
      %p129 = scmp.ne.s32.totalorder %s115, %s116
      %p130 = scmp.eq.s32.totalorder %s18, 1
      %p131 = por %p129, %p130
      %p133 = scmp.ne.s32.totalorder %s116, %s132
      %p134 = scmp.eq.s32.totalorder %s18, 0
      %p135 = por %p133, %p134
      %p136 = scmp.le.s32.totalorder 1, %s12
      %p137 = scmp.lt.s32.totalorder %s12, 3
      %p138 = pnand %p136, %p137
      %p139 = pneg %p138
      // Predicated region
      $region9: #{ffn_gated.1} parent=5 // pred_check
        _
      $region10: #{ffn_gated.1} parent=5 // pred_check_branch
        %141 = sbr.rel (%p138) target = $region12
      $region11: #{ffn_gated.1} parent=5 // pred_region
        %s142 = ssub.s32 %s12, 1
        // Predicated region
        $region13: #{ffn_gated.1} parent=11 // pred_check
          %p143 = pneg %p76
        $region14: #{ffn_gated.1} parent=11 // pred_check_branch
          %145 = sbr.rel (%p143) target = $region16
        $region15: #{ffn_gated.1} parent=11 // pred_region
          %p146 = scmp.lt.s32.totalorder %s22, 0
          %s147 = scalar_select %p146, %s22, 0
          %s148 = smul.addr %s147, 8
          %s149 = scalar_lea.vmem %s1, %s148
        $region16: #{ffn_gated.1} parent=11 // pred_fallthru
          _
        // Predicated region
        $region17: #{ffn_gated.1} parent=11 // pred_check
          %p150 = pneg %p102
        $region18: #{ffn_gated.1} parent=11 // pred_check_branch
          %152 = sbr.rel (%p150) target = $region20
        $region19: #{ffn_gated.1} parent=11 // pred_region
          %s153 = smul.u32 8, %s22
          %p154 = scmp.lt.s32.totalorder %s153, 7
          %s155 = scalar_select %p154, %s153, 7
          %s156 = smul.addr %s155, 8
          %s157 = scalar_lea.vmem %s2, %s156
          %s158 = smul.u32 8, %s22
        $region20: #{ffn_gated.1} parent=11 // pred_fallthru
          _
      $region12: #{ffn_gated.1} parent=5 // pred_fallthru
        _
      %p159 = scmp.lt.s32.totalorder %s12, 2
      // Predicated region
      $region21: #{ffn_gated.1} parent=5 // pred_check
        %p160 = pneg %p159
      $region22: #{ffn_gated.1} parent=5 // pred_check_branch
        %162 = sbr.rel (%p160) target = $region24
      $region23: #{ffn_gated.1} parent=5 // pred_region
        // Predicated region
        $region25: #{ffn_gated.1} parent=23 // pred_check
          %p163 = pneg %p44
        $region26: #{ffn_gated.1} parent=23 // pred_check_branch
          %165 = sbr.rel (%p163) target = $region28
        $region27: #{ffn_gated.1} parent=23 // pred_region
          %p166 = scmp.lt.s32.totalorder %s19, 1
          %s167 = scalar_select %p166, %s19, 1
          %s168 = smul.addr %s167, 8
          %s169 = scalar_lea.vmem %s0, %s168
        $region28: #{ffn_gated.1} parent=23 // pred_fallthru
          _
      $region24: #{ffn_gated.1} parent=5 // pred_fallthru
        _
      %p170 = scmp.le.s32.totalorder 1, %s12
      %p171 = scmp.lt.s32.totalorder %s12, 3
      %p172 = pnand %p170, %p171
      %p173 = pneg %p172
      // Predicated region
      $region29: #{ffn_gated.1} parent=5 // pred_check
        _
      $region30: #{ffn_gated.1} parent=5 // pred_check_branch
        %175 = sbr.rel (%p172) target = $region32
      $region31: #{ffn_gated.1} parent=5 // pred_region
        %s176 = ssub.s32 %s12, 1
        %p177 = scmp.lt.s32.totalorder %s21, 1
        %s178 = scalar_select %p177, %s21, 1
        %s179 = smul.addr %s178, 8
        %s180 = scalar_lea.vmem %s0, %s179
        %p181 = pneg %p50
        %p182 = pneg %p47
        %p183 = scmp.lt.s32.totalorder %s22, 0
        %s184 = scalar_select %p183, %s22, 0
        %s185 = smul.addr %s184, 8
        %s186 = scalar_lea.vmem %s1, %s185
        %p187 = pneg %p76
        %p188 = pneg %p73
        %s189 = smul.u32 8, %s22
        %p190 = scmp.lt.s32.totalorder %s189, 7
        %s191 = scalar_select %p190, %s189, 7
        %s192 = smul.addr %s191, 8
        %s193 = scalar_lea.vmem %s2, %s192
        %p194 = pneg %p102
        %p195 = pneg %p99
        %p196 = pneg %p128
        %p197 = pneg %p125
        %s198 = sand.u32 %s115, 1
        %s199 = scalar_lea.sflag [#allocation4], %s198
        %s200 = sand.u32 %s115, 1
        %s201 = smul.addr %s200, 8
        %s202 = scalar_lea.vmem [#allocation3], %s201
        %p203 = scmp.lt.s32.totalorder %s21, 1
        %s204 = scalar_select %p203, %s21, 1
        %s205 = smul.addr %s204, 8
        %s206 = scalar_lea.vmem %s0, %s205
        %p207 = scmp.lt.s32.totalorder %s22, 0
        %s208 = scalar_select %p207, %s22, 0
        %s209 = smul.addr %s208, 8
        %s210 = scalar_lea.vmem %s1, %s209
        %s211 = smul.u32 8, %s22
        %p212 = scmp.lt.s32.totalorder %s211, 7
        %s213 = scalar_select %p212, %s211, 7
        %s214 = smul.addr %s213, 8
        %s215 = scalar_lea.vmem %s2, %s214
        %s216 = smul.u32 8, %s22
        %p217 = scmp.eq.s32.totalorder %s22, 0
        // Predicated region
        $region33: #{ffn_gated.1} parent=31 // pred_check
          %p218 = pneg %p217
        $region34: #{ffn_gated.1} parent=31 // pred_check_branch
          %220 = sbr.rel (%p218) target = $region36
        $region35: #{ffn_gated.1} parent=31 // pred_region
          %vm221 = vcmask 261120
          %222 = vst.msk [vmem:[#allocation2] sm:$0xff] %vm221, 0.0
        $region36: #{ffn_gated.1} parent=31 // pred_fallthru
          _
        %v223 = vld [vmem:[%s206] sm:$0xff]
        %v224 = vld [vmem:[%s210] sm:$0xff]
        %v225 = vld [vmem:[%s210 + $0x8] sm:$0xff]
        %v226 = vld [vmem:[%s210 + $0x10] sm:$0xff]
        %v227 = vld [vmem:[%s210 + $0x18] sm:$0xff]
        %vm228 = vcmask 261120
        %v230 = vsel %vm228, %v223, 0
        %232 = vmatprep.subr.mxu0 0.0
        %233 = vmatpush1.msra.mxu0 0.0
        %234 = vmatprep.subr.mxu0 0.0
        %235 = vmatpush1.msra.mxu0 0.0
        %236 = vmatprep.subr.mxu0 0.0
        %237 = vmatpush1.msra.mxu0 0.0
        %238 = vmatprep.subr.mxu0 0.0
        %239 = vmatpush1.msra.mxu0 0.0
        %240 = vmatprep.subr.mxu0 0.0
        %241 = vmatpush1.msra.mxu0 0.0
        %242 = vmatprep.subr.mxu0 0.0
        %243 = vmatpush1.msra.mxu0 0.0
        %244 = vmatprep.subr.mxu0 0.0
        %245 = vmatpush1.msra.mxu0 0.0
        %246 = vmatprep.subr.mxu0 0.0
        %247 = vmatpush1.msra.mxu0 0.0
        %248 = vmatprep.subr.mxu0 0.0
        %249 = vmatpush1.msra.mxu0 0.0
        %250 = vmatprep.subr.mxu0 0.0
        %251 = vmatpush1.msra.mxu0 0.0
        %252 = vmatprep.subr.mxu0 0.0
        %253 = vmatpush1.msra.mxu0 0.0
        %254 = vmatprep.subr.mxu0 0.0
        %255 = vmatpush1.msra.mxu0 0.0
        %256 = vmatprep.subr.mxu0 0.0
        %257 = vmatpush1.msra.mxu0 %v227
        %258 = vmatprep.subr.mxu0 0.0
        %259 = vmatpush1.msra.mxu0 %v226
        %260 = vmatprep.subr.mxu0 0.0
        %261 = vmatpush1.msra.mxu0 %v225
        %262 = vmatprep.subr.mxu0 0.0
        %263 = vmatpush1.msra.mxu0 %v224
        %264 = vmatprep.subr.mxu0 0.0
        %265 = vmatpush2.msra.mxu0 0.0
        %266 = vmatprep.subr.mxu0 0.0
        %267 = vmatpush2.msra.mxu0 0.0
        %268 = vmatprep.subr.mxu0 0.0
        %269 = vmatpush2.msra.mxu0 0.0
        %270 = vmatprep.subr.mxu0 0.0
        %271 = vmatpush2.msra.mxu0 0.0
        %272 = vmatprep.subr.mxu0 0.0
        %273 = vmatpush2.msra.mxu0 0.0
        %274 = vmatprep.subr.mxu0 0.0
        %275 = vmatpush2.msra.mxu0 0.0
        %276 = vmatprep.subr.mxu0 0.0
        %277 = vmatpush2.msra.mxu0 0.0
        %278 = vmatprep.subr.mxu0 0.0
        %279 = vmatpush2.msra.mxu0 0.0
        %280 = vmatprep.subr.mxu0 0.0
        %281 = vmatpush2.msra.mxu0 0.0
        %282 = vmatprep.subr.mxu0 0.0
        %283 = vmatpush2.msra.mxu0 0.0
        %284 = vmatprep.subr.mxu0 0.0
        %285 = vmatpush2.msra.mxu0 0.0
        %286 = vmatprep.subr.mxu0 0.0
        %287 = vmatpush2.msra.mxu0 0.0
        %288 = vmatprep.subr.mxu0 0.0
        %289 = vmatpush2.msra.mxu0 0.0
        %290 = vmatprep.subr.mxu0 0.0
        %291 = vmatpush2.msra.mxu0 0.0
        %292 = vmatprep.subr.mxu0 0.0
        %293 = vmatpush2.msra.mxu0 0.0
        %294 = vmatprep.subr.mxu0 0.0
        %295 = vmatpush2.msra.mxu0 0.0
        %296 = vmatprep.mubr.f32.mxu0 0.0
        %297 = vmatmul.mubr.f32.gmra.mxu0 %v230
        %v298 = vpop.f32.mrf.mxu0
        %v299 = vadd.f32 0.0, %v298
        %v300 = vpop.f32.mrf.mxu0
        %301 = vdwg.mxu0
        %v302 = vmul.f32 %v299, %v299
        %v303 = vmul.f32 %v299, %v302
        %v304 = vmul.f32 %v303, 0.044715
        %v305 = vadd.f32 %v299, %v304
        %v306 = vmul.f32 %v305, 0.7978846
        %v307 = vtanh.pop %v306
        %v308 = vadd.f32 %v307, 1.0
        %v309 = vmul.f32 %v308, 0.5
        %v310 = vmul.f32 %v299, %v309
        %312 = vrot.lane.b32.xlu0 %v299, 64
        %v313 = vpop.permute.xlu0 %312
        %v315 = vmul.f32 %v310, %v313
        %v316 = vld [vmem:[#allocation2] sm:$0xff]
        %v317 = vld [vmem:[%s215] sm:$0xff]
        %v318 = vld [vmem:[%s215 + $0x8] sm:$0xff]
        %v319 = vld [vmem:[%s215 + $0x10] sm:$0xff]
        %v320 = vld [vmem:[%s215 + $0x18] sm:$0xff]
        %v321 = vld [vmem:[%s215 + $0x20] sm:$0xff]
        %v322 = vld [vmem:[%s215 + $0x28] sm:$0xff]
        %v323 = vld [vmem:[%s215 + $0x30] sm:$0xff]
        %v324 = vld [vmem:[%s215 + $0x38] sm:$0xff]
        %vm325 = vcmask 523264
        %v327 = vsel %vm325, %v315, 0
        %329 = vmatprep.subr.mxu0 0.0
        %330 = vmatpush1.msra.mxu0 0.0
        %331 = vmatprep.subr.mxu0 0.0
        %332 = vmatpush1.msra.mxu0 0.0
        %333 = vmatprep.subr.mxu0 0.0
        %334 = vmatpush1.msra.mxu0 0.0
        %335 = vmatprep.subr.mxu0 0.0
        %336 = vmatpush1.msra.mxu0 0.0
        %337 = vmatprep.subr.mxu0 0.0
        %338 = vmatpush1.msra.mxu0 0.0
        %339 = vmatprep.subr.mxu0 0.0
        %340 = vmatpush1.msra.mxu0 0.0
        %341 = vmatprep.subr.mxu0 0.0
        %342 = vmatpush1.msra.mxu0 0.0
        %343 = vmatprep.subr.mxu0 0.0
        %344 = vmatpush1.msra.mxu0 0.0
        %345 = vmatprep.subr.mxu0 0.0
        %346 = vmatpush1.msra.mxu0 %v324
        %347 = vmatprep.subr.mxu0 0.0
        %348 = vmatpush1.msra.mxu0 %v323
        %349 = vmatprep.subr.mxu0 0.0
        %350 = vmatpush1.msra.mxu0 %v322
        %351 = vmatprep.subr.mxu0 0.0
        %352 = vmatpush1.msra.mxu0 %v321
        %353 = vmatprep.subr.mxu0 0.0
        %354 = vmatpush1.msra.mxu0 %v320
        %355 = vmatprep.subr.mxu0 0.0
        %356 = vmatpush1.msra.mxu0 %v319
        %357 = vmatprep.subr.mxu0 0.0
        %358 = vmatpush1.msra.mxu0 %v318
        %359 = vmatprep.subr.mxu0 0.0
        %360 = vmatpush1.msra.mxu0 %v317
        %361 = vmatprep.subr.mxu0 0.0
        %362 = vmatpush2.msra.mxu0 0.0
        %363 = vmatprep.subr.mxu0 0.0
        %364 = vmatpush2.msra.mxu0 0.0
        %365 = vmatprep.subr.mxu0 0.0
        %366 = vmatpush2.msra.mxu0 0.0
        %367 = vmatprep.subr.mxu0 0.0
        %368 = vmatpush2.msra.mxu0 0.0
        %369 = vmatprep.subr.mxu0 0.0
        %370 = vmatpush2.msra.mxu0 0.0
        %371 = vmatprep.subr.mxu0 0.0
        %372 = vmatpush2.msra.mxu0 0.0
        %373 = vmatprep.subr.mxu0 0.0
        %374 = vmatpush2.msra.mxu0 0.0
        %375 = vmatprep.subr.mxu0 0.0
        %376 = vmatpush2.msra.mxu0 0.0
        %377 = vmatprep.subr.mxu0 0.0
        %378 = vmatpush2.msra.mxu0 0.0
        %379 = vmatprep.subr.mxu0 0.0
        %380 = vmatpush2.msra.mxu0 0.0
        %381 = vmatprep.subr.mxu0 0.0
        %382 = vmatpush2.msra.mxu0 0.0
        %383 = vmatprep.subr.mxu0 0.0
        %384 = vmatpush2.msra.mxu0 0.0
        %385 = vmatprep.subr.mxu0 0.0
        %386 = vmatpush2.msra.mxu0 0.0
        %387 = vmatprep.subr.mxu0 0.0
        %388 = vmatpush2.msra.mxu0 0.0
        %389 = vmatprep.subr.mxu0 0.0
        %390 = vmatpush2.msra.mxu0 0.0
        %391 = vmatprep.subr.mxu0 0.0
        %392 = vmatpush2.msra.mxu0 0.0
        %393 = vmatprep.mubr.f32.mxu0 0.0
        %394 = vmatmul.mubr.f32.gmra.mxu0 %v327
        %v395 = vpop.f32.mrf.mxu0
        %v396 = vadd.f32 0.0, %v395
        %v397 = vpop.f32.mrf.mxu0
        %398 = vdwg.mxu0
        %v399 = vadd.f32 %v316, %v396
        %400 = vst.msk [vmem:[#allocation2] sm:$0xff] %vm228, %v399
        // Predicated region
        $region37: #{ffn_gated.1} parent=31 // pred_check
          %p401 = pneg %p217
        $region38: #{ffn_gated.1} parent=31 // pred_check_branch
          %403 = sbr.rel (%p401) target = $region40
        $region39: #{ffn_gated.1} parent=31 // pred_region
          %v404 = vld [vmem:[#allocation2] sm:$0xff]
          %405 = vst.msk [vmem:[%s202] sm:$0xff] %vm228, %v404
        $region40: #{ffn_gated.1} parent=31 // pred_fallthru
          _
        %s406 = sand.u32 %s115, 1
        %s407 = scalar_lea.sflag [#allocation4], %s406
        %s408 = sand.u32 %s115, 1
        %s409 = smul.addr %s408, 8
        %s410 = scalar_lea.vmem [#allocation3], %s409
        // Predicated region
        $region41: #{ffn_gated.1} parent=31 // pred_check
          %p411 = pneg %p125
        $region42: #{ffn_gated.1} parent=31 // pred_check_branch
          %413 = sbr.rel (%p411) target = $region44
        $region43: #{ffn_gated.1} parent=31 // pred_region
          %s415 = ssub.s32 128, 128
          %416 = vsyncadd %s407, %s415
          %s417 = smul.addr %s21, 128
          %s418 = scalar_lea.hbm %s3, %s417
          %s420 = sshll.u32 %s410, 4
          %s421 = int_to_ptr.vmem [resolvable:$true] %s420
          %423 = dma.vmem_to_hbm [thread:$0]  %s421, 128, %s418, %s407
        $region44: #{ffn_gated.1} parent=31 // pred_fallthru
          _
      $region32: #{ffn_gated.1} parent=5 // pred_fallthru
        _
      %p424 = scmp.le.s32.totalorder 2, %s12
      // Predicated region
      $region45: #{ffn_gated.1} parent=5 // pred_check
        %p425 = pneg %p424
      $region46: #{ffn_gated.1} parent=5 // pred_check_branch
        %427 = sbr.rel (%p425) target = $region48
      $region47: #{ffn_gated.1} parent=5 // pred_region
        %s428 = ssub.s32 %s12, 2
        // Predicated region
        $region49: #{ffn_gated.1} parent=47 // pred_check
          %p429 = pneg %p131
        $region50: #{ffn_gated.1} parent=47 // pred_check_branch
          %431 = sbr.rel (%p429) target = $region52
        $region51: #{ffn_gated.1} parent=47 // pred_region
          %s432 = sand.u32 %s116, 1
          %s433 = scalar_lea.sflag [#allocation4], %s432
          %s434 = sand.u32 %s116, 1
          %s435 = smul.addr %s434, 8
          %s436 = scalar_lea.vmem [#allocation3], %s435
          %437 = dma.done %s433, 128
        $region52: #{ffn_gated.1} parent=47 // pred_fallthru
          _
      $region48: #{ffn_gated.1} parent=5 // pred_fallthru
        _
    $region6: #{ffn_gated.1} parent=1 // loop_footer
      %s16 = sadd.s32 1, %s12
    $region7: #{ffn_gated.1} parent=1 // loop_footer_branch
      %11 = sbr.rel target = $region3
    $region8: #{ffn_gated.1} parent=1 // loop_exit
      _
    %438 = vsyncpa [#allocation4], 1
    %s439 = scalar_lea.sflag [#allocation4], 1
    %440 = vsyncpa %s439, 1

</llo_original>
